<compile_context>
chip_gen: v6e
topology: v6e:2x2x1
jax: 0.10.0
libtpu: 0.0.40
codegen_flags: <defaults>
</compile_context>

<pallas_src>
import functools

import jax
import jax.numpy as jnp
from jax.experimental import pallas as pl
from jax.experimental.pallas import tpu as pltpu


def _round_up(v: int, m: int) -> int:
    return (v + m - 1) // m * m


def sofm_winner_kernel(x_ref, gt_ref, bias_ref, win_ref):
    """One batch tile: winners = argmax_j (x . g_j - 0.5*||g_j||^2)."""
    x = x_ref[...]                               # (TN, Dp) f32, lane-dense
    gt = gt_ref[...]                             # (Dp, Mp) bf16, VMEM-resident
    bias = bias_ref[...]                         # (1, Mp) f32, VMEM-resident

    # Score matmul on the MXU: single bf16 pass, K = Dp = 128 after padding,
    # f32 accumulation.  g^T is pre-transposed/pre-cast in the wrapper, so no
    # per-step XLU transpose of the resident parameter.
    xg = jnp.dot(x.astype(jnp.bfloat16), gt,
                 preferred_element_type=jnp.float32)        # (TN, Mp)

    # score_j = x.g_j - 0.5*||g_j||^2  (argmax == argmin of distance).
    scores = xg + bias                                       # f32 VPU add

    # First-occurrence argmax (matches torch .min tie-break up to bf16
    # rounding of the score matmul).
    winners = jnp.argmax(scores, axis=-1).astype(jnp.int32)  # (TN,)

    # Tiny output: 4 B per row.  Lane width 1 -> masked store, but it is
    # negligible next to the x DMA / matmul.
    win_ref[...] = winners[:, None]


@functools.partial(jax.jit, static_argnames=("tile_n",))
def sofm_forward(x, som_grid, *, tile_n=512):
    """x: (N, D) f32; som_grid: (M, D) f32 -> (N, D) f32 (= grid[winners])."""
    N, D = x.shape
    M, _ = som_grid.shape

    # Lane-dense / full-contraction padding of the feature and map-unit axes.
    D_pad = _round_up(max(D, 128), 128)
    M_pad = _round_up(max(M, 128), 128)

    # Batch tiling: biggest tile that makes sense.  tile_n = N for small
    # batches (single grid step), 512 default otherwise.  Keep the (TN, M_pad)
    # f32 score intermediate modest (512*128*4 = 256 KiB) to avoid spill.
    tile_n = max(8, min(_round_up(tile_n, 8), _round_up(N, 8)))
    N_pad = _round_up(N, tile_n)
    num_tiles = N_pad // tile_n

    xf = x.astype(jnp.float32)
    gf = som_grid.astype(jnp.float32)

    # Padded, lane-dense input tile source.
    x_pad = jnp.zeros((N_pad, D_pad), jnp.float32).at[:N, :D].set(xf)

    # Resident parameters, precomputed once per parameter value:
    #   g^T : (D_pad, M_pad) bf16, already transposed (zero rows for padded D)
    #   bias: (1, M_pad) f32 = -0.5*||g_j||^2; padded units get -1e30 so they
    #         can never be the argmax winner.
    gt = jnp.zeros((D_pad, M_pad), jnp.bfloat16).at[:D, :M].set(
        gf.T.astype(jnp.bfloat16))
    bias = jnp.full((1, M_pad), jnp.float32(-1e30), jnp.float32).at[0, :M].set(
        -0.5 * jnp.sum(gf * gf, axis=-1))

    cost = pl.CostEstimate(
        flops=2 * N_pad * D_pad * M_pad,
        transcendentals=0,
        bytes_accessed=(N_pad * D_pad * 4      # x tiles
                        + D_pad * M_pad * 2    # resident g^T (bf16)
                        + M_pad * 4            # resident bias
                        + N_pad * 4),          # winners out
    )

    winners_2d = pl.pallas_call(
        sofm_winner_kernel,
        out_shape=jax.ShapeDtypeStruct((N_pad, 1), jnp.int32),
        grid=(num_tiles,),
        in_specs=[
            pl.BlockSpec((tile_n, D_pad), lambda i: (i, 0)),   # x tile (pipelined)
            pl.BlockSpec((D_pad, M_pad), lambda i: (0, 0)),    # g^T, resident
            pl.BlockSpec((1, M_pad), lambda i: (0, 0)),        # bias, resident
        ],
        out_specs=pl.BlockSpec((tile_n, 1), lambda i: (i, 0)),
        compiler_params=pltpu.CompilerParams(
            dimension_semantics=("parallel",),   # feeds both TCs on v7x
        ),
        cost_estimate=cost,
    )(x_pad, gt, bias)

    winners = winners_2d[:N, 0]
    # Exact f32 gather of the selected map units -> bit-exact grid rows.
    return jnp.take(som_grid, winners, axis=0)


def reference_forward(x, som_grid):
    """Pure-JAX reference of the PyTorch forward (eval mode)."""
    d = jnp.sqrt(
        jnp.maximum(
            jnp.sum(x * x, -1, keepdims=True)
            + jnp.sum(som_grid * som_grid, -1)[None, :]
            - 2.0 * x @ som_grid.T,
            0.0,
        )
    )
    winners = jnp.argmin(d, axis=1)
    return som_grid[winners]


if __name__ == "__main__":
    hidden_dim = 32
    map_size = (8, 16)                      # M = 128 map units
    batch = 64

    key = jax.random.PRNGKey(0)
    kx, kg = jax.random.split(key)
    x = jax.random.normal(kx, (batch, hidden_dim), dtype=jnp.float32)
    # nn.Parameter(torch.randn(map_h*map_w, hidden_dim)) -> deterministic init
    som_grid = jax.random.normal(
        kg, (map_size[0] * map_size[1], hidden_dim), dtype=jnp.float32)

    # Default tile_n clamps to the whole batch -> one big grid step.
    out = sofm_forward(x, som_grid)
    jax.block_until_ready(out)
    assert out.shape == (batch, hidden_dim)

    ref = reference_forward(x, som_grid)

    # 1) Every output row must be exactly one of the SOM grid rows (the
    #    wrapper gather is f32-exact by construction).
    row_err = jnp.min(
        jnp.max(jnp.abs(out[:, None, :] - som_grid[None, :, :]), axis=-1),
        axis=-1)
    assert jnp.all(row_err == 0.0), "output rows are not exact grid rows"

    # 2) Tolerance-aware winner check (bf16 score matmul may flip near-ties):
    #    the chosen unit's true distance must be within a small tolerance of
    #    the true minimum distance.
    d_chosen = jnp.linalg.norm(x - out, axis=-1)
    d_min = jnp.min(
        jnp.linalg.norm(x[:, None, :] - som_grid[None, :, :], axis=-1), axis=-1)
    assert jnp.all(d_chosen <= d_min + 5e-2), "chosen map unit not (near-)optimal"

    # 3) In the common (non-near-tie) case the result matches the f32 reference
    #    exactly; require that for the vast majority of rows.
    exact_rows = jnp.all(out == ref, axis=-1)
    assert jnp.mean(exact_rows.astype(jnp.float32)) >= 0.9, \
        "too many winner mismatches vs f32 reference"

    print("KERNEL_OK")
</pallas_src>

<mosaic_0001>
module attributes {stable_mosaic.version = 11 : i64} {
  func.func @sofm_winner_kernel(%arg0: i32, %arg1: memref<64x128xf32, #tpu.memory_space<vmem>>, %arg2: memref<128x128xbf16, #tpu.memory_space<vmem>>, %arg3: memref<1x128xf32, #tpu.memory_space<vmem>>, %arg4: memref<64x1xi32, #tpu.memory_space<vmem>>) attributes {dimension_semantics = [#tpu.dimension_semantics<parallel>], iteration_bounds = array<i64: 1>, scalar_prefetch = 0 : i64, scratch_operands = 0 : i64, tpu.core_type = #tpu.core_type<tc>, window_params = [{transform_indices = @transform_0, window_bounds = array<i64: 64, 128>}, {pipeline_mode = #tpu.pipeline_mode<synchronous>, transform_indices = @transform_1, window_bounds = array<i64: 128, 128>}, {pipeline_mode = #tpu.pipeline_mode<synchronous>, transform_indices = @transform_2, window_bounds = array<i64: 1, 128>}, {transform_indices = @transform_3, window_bounds = array<i64: 64, 1>}]} {
    %c0 = arith.constant 0 : index
    %c0_0 = arith.constant 0 : index
    %0 = vector.load %arg1[%c0, %c0_0] : memref<64x128xf32, #tpu.memory_space<vmem>>, vector<64x128xf32>
    %c0_1 = arith.constant 0 : index
    %c0_2 = arith.constant 0 : index
    %1 = vector.load %arg2[%c0_1, %c0_2] : memref<128x128xbf16, #tpu.memory_space<vmem>>, vector<128x128xbf16>
    %c0_3 = arith.constant 0 : index
    %c0_4 = arith.constant 0 : index
    %2 = vector.load %arg3[%c0_3, %c0_4] : memref<1x128xf32, #tpu.memory_space<vmem>>, vector<1x128xf32>
    %3 = arith.truncf %0 : vector<64x128xf32> to vector<64x128xbf16>
    %cst = arith.constant dense<0.000000e+00> : vector<64x128xf32>
    %4 = tpu.matmul %3, %1, %cst {dimension_numbers = #tpu.dot_dimension_numbers<[1], [0], [0], [1], [0, 0, 1, 1], [], []>} : vector<64x128xbf16>, vector<128x128xbf16>, vector<64x128xf32> -> vector<64x128xf32>
    %5 = vector.broadcast %2 : vector<1x128xf32> to vector<64x128xf32>
    %6 = arith.addf %4, %5 : vector<64x128xf32>
    %7 = tpu.reduce_index %6 {axis = 1 : i32, kind = #tpu.reduction_kind<arg_max>} : vector<64x128xf32> -> vector<64xi32>
    %8 = vector.shape_cast %7 : vector<64xi32> to vector<64x1xi32>
    %c0_5 = arith.constant 0 : index
    %c0_6 = arith.constant 0 : index
    %9 = vector.load %arg4[%c0_5, %c0_6] : memref<64x1xi32, #tpu.memory_space<vmem>>, vector<64x1xi32>
    tpu.vector_store %arg4[%c0_5, %c0_6], %8 {strides = array<i32>} : memref<64x1xi32, #tpu.memory_space<vmem>>, vector<64x1xi32>,
    return
  }
  func.func @transform_0(%arg0: i32) -> (i32, i32) {
    %c0_i32 = arith.constant 0 : i32
    %c0_i32_0 = arith.constant 0 : i32
    return %arg0, %c0_i32 : i32, i32
  }
  func.func @transform_1(%arg0: i32) -> (i32, i32) {
    %c0_i32 = arith.constant 0 : i32
    %c0_i32_0 = arith.constant 0 : i32
    %c0_i32_1 = arith.constant 0 : i32
    return %c0_i32, %c0_i32_0 : i32, i32
  }
  func.func @transform_2(%arg0: i32) -> (i32, i32) {
    %c0_i32 = arith.constant 0 : i32
    %c0_i32_0 = arith.constant 0 : i32
    %c0_i32_1 = arith.constant 0 : i32
    return %c0_i32, %c0_i32_0 : i32, i32
  }
  func.func @transform_3(%arg0: i32) -> (i32, i32) {
    %c0_i32 = arith.constant 0 : i32
    %c0_i32_0 = arith.constant 0 : i32
    return %arg0, %c0_i32 : i32, i32
  }
}

</mosaic_0001>

<llo_original>
// kernel: sofm_forward.1
$region0: #{sofm_forward.1}
  #allocation0 [shape = 'u32[]', space=smem, size = 0x4, offset = 0x4, fixed_abs, tag = 'smem constant byte address 0x4 - core index']
  #allocation1 [shape = 'u32[144,128]{1,0:T(1,128)}', space=vmem, size = 0x12000, scoped, tag = 'internal scratch']
  %s0 = inlined_call_operand.vmem [shape: f32[64,128], index: 0, kind: input, shape index: {}]
  %s1 = inlined_call_operand.vmem [shape: bf16[128,128], index: 1, kind: input, shape index: {}]
  %s2 = inlined_call_operand.vmem [shape: f32[1,128], index: 2, kind: input, shape index: {}]
  %s3 = inlined_call_operand.vmem [shape: s32[64,1], index: 3, kind: output, shape index: {}]
  %s4 = sld [smem:[#allocation0]]
  $region22: #{sofm_forward.1} parent=0
    _
  %s6 = ssub.s32 1, %s4
  %s7 = scalar_select 0, %s6, %s4
  // Predicated region
  $region2: #{sofm_forward.1} parent=0 // pred_check
    _
  $region3: #{sofm_forward.1} parent=0 // pred_check_branch
    %9 = sbr.rel (0) target = $region5
  $region4: #{sofm_forward.1} parent=0 // pred_region
    _
  $region5: #{sofm_forward.1} parent=0 // pred_fallthru
    _
  // Predicated region
  $region6: #{sofm_forward.1} parent=0 // pred_check
    _
  $region7: #{sofm_forward.1} parent=0 // pred_check_branch
    %11 = sbr.rel (0) target = $region9
  $region8: #{sofm_forward.1} parent=0 // pred_region
    _
  $region9: #{sofm_forward.1} parent=0 // pred_fallthru
    _
  // Predicated region
  $region10: #{sofm_forward.1} parent=0 // pred_check
    _
  $region11: #{sofm_forward.1} parent=0 // pred_check_branch
    %13 = sbr.rel (0) target = $region13
  $region12: #{sofm_forward.1} parent=0 // pred_region
    _
  $region13: #{sofm_forward.1} parent=0 // pred_fallthru
    _
  %v15 = vld [vmem:[%s0] sm:$0xff]
  %v16 = vld [vmem:[%s0 + $0x8] sm:$0xff]
  %v17 = vld [vmem:[%s0 + $0x10] sm:$0xff]
  %v18 = vld [vmem:[%s0 + $0x18] sm:$0xff]
  %v19 = vld [vmem:[%s0 + $0x20] sm:$0xff]
  %v20 = vld [vmem:[%s0 + $0x28] sm:$0xff]
  %v21 = vld [vmem:[%s0 + $0x30] sm:$0xff]
  %v22 = vld [vmem:[%s0 + $0x38] sm:$0xff]
  %v23 = vld [vmem:[%s1] sm:$0xf]
  %v24 = vld [vmem:[%s1 + $0x4] sm:$0xf]
  %v25 = vld [vmem:[%s1 + $0x8] sm:$0xf]
  %v26 = vld [vmem:[%s1 + $0xc] sm:$0xf]
  %v27 = vld [vmem:[%s1 + $0x10] sm:$0xf]
  %v28 = vld [vmem:[%s1 + $0x14] sm:$0xf]
  %v29 = vld [vmem:[%s1 + $0x18] sm:$0xf]
  %v30 = vld [vmem:[%s1 + $0x1c] sm:$0xf]
  %v31 = vld [vmem:[%s1 + $0x20] sm:$0xf]
  %v32 = vld [vmem:[%s1 + $0x24] sm:$0xf]
  %v33 = vld [vmem:[%s1 + $0x28] sm:$0xf]
  %v34 = vld [vmem:[%s1 + $0x2c] sm:$0xf]
  %v35 = vld [vmem:[%s1 + $0x30] sm:$0xf]
  %v36 = vld [vmem:[%s1 + $0x34] sm:$0xf]
  %v37 = vld [vmem:[%s1 + $0x38] sm:$0xf]
  %v38 = vld [vmem:[%s1 + $0x3c] sm:$0xf]
  %v39 = vld [vmem:[%s2] sm:$0x1]
  %v40 = vpack.c.bf16 %v16, %v15
  %v41 = vpack.c.bf16 %v18, %v17
  %v42 = vpack.c.bf16 %v20, %v19
  %v43 = vpack.c.bf16 %v22, %v21
  %v45 = vlaneseq
  %v46 = vshrl.u32 %v45, 7
  %v47 = vsub.s32 0, %v46
  %v48 = vrot.slane %v39, %v47
  %v66 = vunpack.c.l.b16 %v23
  %v67 = vunpack.c.l.b16 %v24
  %v68 = vunpack.c.l.b16 %v25
  %v69 = vunpack.c.l.b16 %v26
  %v70 = vunpack.c.l.b16 %v27
  %v71 = vunpack.c.l.b16 %v28
  %v72 = vunpack.c.l.b16 %v29
  %v73 = vunpack.c.l.b16 %v30
  %v74 = vunpack.c.l.b16 %v31
  %v75 = vunpack.c.l.b16 %v32
  %v76 = vunpack.c.l.b16 %v33
  %v77 = vunpack.c.l.b16 %v34
  %v78 = vunpack.c.l.b16 %v35
  %v79 = vunpack.c.l.b16 %v36
  %v80 = vunpack.c.l.b16 %v37
  %v81 = vunpack.c.l.b16 %v38
  %v82 = vpack.c.b16 %v67, %v66
  %v83 = vpack.c.b16 %v69, %v68
  %v84 = vpack.c.b16 %v71, %v70
  %v85 = vpack.c.b16 %v73, %v72
  %v86 = vpack.c.b16 %v75, %v74
  %v87 = vpack.c.b16 %v77, %v76
  %v88 = vpack.c.b16 %v79, %v78
  %v89 = vpack.c.b16 %v81, %v80
  %98 = vmatprep.subr.bf16.mxu0 0
  %99 = vmatpush1.bf16.msra.mxu0 %v89
  %100 = vmatprep.subr.bf16.mxu0 0
  %101 = vmatpush1.bf16.msra.mxu0 %v88
  %102 = vmatprep.subr.bf16.mxu0 0
  %103 = vmatpush1.bf16.msra.mxu0 %v87
  %104 = vmatprep.subr.bf16.mxu0 0
  %105 = vmatpush1.bf16.msra.mxu0 %v86
  %106 = vmatprep.subr.bf16.mxu0 0
  %107 = vmatpush1.bf16.msra.mxu0 %v85
  %108 = vmatprep.subr.bf16.mxu0 0
  %109 = vmatpush1.bf16.msra.mxu0 %v84
  %110 = vmatprep.subr.bf16.mxu0 0
  %111 = vmatpush1.bf16.msra.mxu0 %v83
  %112 = vmatprep.subr.bf16.mxu0 0
  %113 = vmatpush1.bf16.msra.mxu0 %v82
  %114 = vmatprep.subr.bf16.mxu0 0
  %115 = vmatpush2.bf16.msra.mxu0 0
  %116 = vmatprep.subr.bf16.mxu0 0
  %117 = vmatpush2.bf16.msra.mxu0 0
  %118 = vmatprep.subr.bf16.mxu0 0
  %119 = vmatpush2.bf16.msra.mxu0 0
  %120 = vmatprep.subr.bf16.mxu0 0
  %121 = vmatpush2.bf16.msra.mxu0 0
  %122 = vmatprep.subr.bf16.mxu0 0
  %123 = vmatpush2.bf16.msra.mxu0 0
  %124 = vmatprep.subr.bf16.mxu0 0
  %125 = vmatpush2.bf16.msra.mxu0 0
  %126 = vmatprep.subr.bf16.mxu0 0
  %127 = vmatpush2.bf16.msra.mxu0 0
  %128 = vmatprep.subr.bf16.mxu0 0
  %129 = vmatpush2.bf16.msra.mxu0 0
  %130 = vmatprep.mubr.bf16.mxu0 0
  %131 = vmatmul.mubr.bf16.gmra.mxu0 %v40
  %v132 = vpop.f32.mrf.mxu0
  %v133 = vadd.f32 %v48, %v132
  %v134 = vpop.f32.mrf.mxu0
  %v135 = vpop.f32.mrf.mxu0
  %v136 = vadd.f32 %v48, %v135
  %v137 = vpop.f32.mrf.mxu0
  %138 = vmatprep.mubr.bf16.mxu0 0
  %139 = vmatmul.mubr.bf16.gmra.mxu0 %v41
  %v140 = vpop.f32.mrf.mxu0
  %v141 = vadd.f32 %v48, %v140
  %v142 = vpop.f32.mrf.mxu0
  %v143 = vpop.f32.mrf.mxu0
  %v144 = vadd.f32 %v48, %v143
  %v145 = vpop.f32.mrf.mxu0
  %146 = vmatprep.mubr.bf16.mxu0 0
  %147 = vmatmul.mubr.bf16.gmra.mxu0 %v42
  %v148 = vpop.f32.mrf.mxu0
  %v149 = vadd.f32 %v48, %v148
  %v150 = vpop.f32.mrf.mxu0
  %v151 = vpop.f32.mrf.mxu0
  %v152 = vadd.f32 %v48, %v151
  %v153 = vpop.f32.mrf.mxu0
  %154 = vmatprep.mubr.bf16.mxu0 0
  %155 = vmatmul.mubr.bf16.gmra.mxu0 %v43
  %v156 = vpop.f32.mrf.mxu0
  %v157 = vadd.f32 %v48, %v156
  %v158 = vpop.f32.mrf.mxu0
  %v159 = vpop.f32.mrf.mxu0
  %v160 = vadd.f32 %v48, %v159
  %v161 = vpop.f32.mrf.mxu0
  %162 = vdwg.mxu0
  %163 = vmax.index.xlane.f32.xlu0 %v133
  %v164 = vpop.xlane.xlu0 %163
  %165 = vmax.index.xlane.f32.xlu0 %v136
  %v166 = vpop.xlane.xlu0 %165
  %167 = vmax.index.xlane.f32.xlu0 %v141
  %v168 = vpop.xlane.xlu0 %167
  %169 = vmax.index.xlane.f32.xlu0 %v144
  %v170 = vpop.xlane.xlu0 %169
  %171 = vmax.index.xlane.f32.xlu0 %v149
  %v172 = vpop.xlane.xlu0 %171
  %173 = vmax.index.xlane.f32.xlu0 %v152
  %v174 = vpop.xlane.xlu0 %173
  %175 = vmax.index.xlane.f32.xlu0 %v157
  %v176 = vpop.xlane.xlu0 %175
  %177 = vmax.index.xlane.f32.xlu0 %v160
  %v178 = vpop.xlane.xlu0 %177
  %vm179 = vcmask 7168
  %180 = vst.msk [vmem:[%s3] sm:$0xff] %vm179, %v164
  %181 = vst.msk [vmem:[%s3 + $0x8] sm:$0xff] %vm179, %v166
  %182 = vst.msk [vmem:[%s3 + $0x10] sm:$0xff] %vm179, %v168
  %183 = vst.msk [vmem:[%s3 + $0x18] sm:$0xff] %vm179, %v170
  %184 = vst.msk [vmem:[%s3 + $0x20] sm:$0xff] %vm179, %v172
  %185 = vst.msk [vmem:[%s3 + $0x28] sm:$0xff] %vm179, %v174
  %186 = vst.msk [vmem:[%s3 + $0x30] sm:$0xff] %vm179, %v176
  %187 = vst.msk [vmem:[%s3 + $0x38] sm:$0xff] %vm179, %v178
  // Predicated region
  $region14: #{sofm_forward.1} parent=0 // pred_check
    _
  $region15: #{sofm_forward.1} parent=0 // pred_check_branch
    %189 = sbr.rel (0) target = $region17
  $region16: #{sofm_forward.1} parent=0 // pred_region
    _
  $region17: #{sofm_forward.1} parent=0 // pred_fallthru
    _
  // Predicated region
  $region18: #{sofm_forward.1} parent=0 // pred_check
    _
  $region19: #{sofm_forward.1} parent=0 // pred_check_branch
    %191 = sbr.rel (0) target = $region21
  $region20: #{sofm_forward.1} parent=0 // pred_region
    _
  $region21: #{sofm_forward.1} parent=0 // pred_fallthru
    _

</llo_original>
